<compile_context>
chip_gen: v7x
topology: tpu7x:2x2x1
jax: 0.10.0
libtpu: 0.0.40
codegen_flags: <defaults>
</compile_context>

<pallas_src>
import functools

import jax
import jax.numpy as jnp
from jax.experimental import pallas as pl
from jax.experimental.pallas import tpu as pltpu


LANE = 128                 # TPU lane width: keep last dims lane-dense
TILE_K_DEFAULT = 512       # contraction (neighbor) tile for the A @ H reduction


def _round_up(x, m):
    return (x + m - 1) // m * m


def _pad2(a, rows, cols):
    """Zero-pad a 2-D array to (rows, cols), keeping dtype."""
    return jnp.zeros((rows, cols), a.dtype).at[: a.shape[0], : a.shape[1]].set(a)


def _tpu_kind():
    try:
        return jax.devices()[0].device_kind.lower()
    except Exception:
        return ""


def _vmem_limit_bytes(kind):
    # v5e/v6e have 128 MiB VMEM per core; v7x only 64 MiB per TensorCore, so
    # stay conservative there (and on unknown chips).
    if "v5" in kind or "v6" in kind:
        return 96 * 1024 * 1024
    return 48 * 1024 * 1024


def _row_tile_default(kind):
    # Bigger row tiles amortize the ~0.35 us per-grid-step overhead; cap at 256
    # on v7x to respect the smaller per-core VMEM.
    return 256 if "v7" in kind else 512


def _use_split_dots(kind):
    # v5e's MXU is 128-wide: the fused K=2*h_p matmul gives no per-pass benefit
    # there and the concat is a pure VMEM copy -> use two accumulating dots.
    return ("v5 lite" in kind) or ("v5e" in kind) or ("v5litepod" in kind)


# ----------------------------------------------------------------------------
# Kernels
# ----------------------------------------------------------------------------
def linear_relu_kernel(x_ref, w_ref, b_ref, o_ref):
    # o = relu(x @ Wlin.T + b); bf16 operands on the MXU, f32 accumulation,
    # bias/ReLU in f32, stored as bf16.
    h = jnp.dot(x_ref[...], w_ref[...], preferred_element_type=jnp.float32)
    o_ref[...] = jnp.maximum(h + b_ref[...], 0.0).astype(o_ref.dtype)


def _sage_update(agg, hrow, w_ref, split_dots):
    """concat([agg, hrow]) @ [Wl.T ; Wr.T]  (fused K=2*h_p, or two dots on v5e)."""
    h_p = w_ref.shape[0] // 2
    if split_dots:
        return (jnp.dot(agg, w_ref[0:h_p, :], preferred_element_type=jnp.float32)
                + jnp.dot(hrow, w_ref[h_p:2 * h_p, :],
                          preferred_element_type=jnp.float32))
    z_in = jnp.concatenate([agg, hrow], axis=-1)
    return jnp.dot(z_in, w_ref[...], preferred_element_type=jnp.float32)


def sage_kernel(split_dots, a_ref, h_ref, hrow_ref, invdeg_ref, w_ref, b_ref,
                o_ref, acc_ref):
    # SAGEConv(aggr='mean'):
    #   agg = (1/deg) * sum_k A_counts[rows, k_blk] @ H[k_blk]   (f32 VMEM acc)
    #   out = concat([agg, H_rows]) @ [Wl.T ; Wr.T] + b
    k = pl.program_id(1)

    @pl.when(k == 0)
    def _():
        acc_ref[...] = jnp.zeros_like(acc_ref)

    acc_ref[...] += jnp.dot(a_ref[...], h_ref[...],
                            preferred_element_type=jnp.float32)

    @pl.when(k == pl.num_programs(1) - 1)
    def _():
        agg = (acc_ref[...] * invdeg_ref[...]).astype(jnp.bfloat16)
        out = _sage_update(agg, hrow_ref[...], w_ref, split_dots) + b_ref[...]
        o_ref[...] = out.astype(o_ref.dtype)


def sage_relu_proj_kernel(split_dots, a_ref, h_ref, hrow_ref, invdeg_ref,
                          w_ref, b_ref, wout_ref, o_ref, acc_ref):
    # Second SAGE layer fused with the trailing ReLU and the final projection
    #   x = self.weight.mm(x.t()).t()  ==  x @ weight.T
    k = pl.program_id(1)

    @pl.when(k == 0)
    def _():
        acc_ref[...] = jnp.zeros_like(acc_ref)

    acc_ref[...] += jnp.dot(a_ref[...], h_ref[...],
                            preferred_element_type=jnp.float32)

    @pl.when(k == pl.num_programs(1) - 1)
    def _():
        agg = (acc_ref[...] * invdeg_ref[...]).astype(jnp.bfloat16)
        z = _sage_update(agg, hrow_ref[...], w_ref, split_dots) + b_ref[...]
        z = jnp.maximum(z, 0.0)
        o_ref[...] = jnp.dot(z.astype(jnp.bfloat16), wout_ref[...],
                             preferred_element_type=jnp.float32)


# ----------------------------------------------------------------------------
# Host-side glue
# ----------------------------------------------------------------------------
def build_adjacency(edge_index, n_pad):
    """Exact edge-count matrix (bf16) + f32 1/deg_in column vector.

    counts[i, j] = #edges j->i.  The 1/deg mean scale is applied in-kernel in
    f32 after the A @ H contraction, so the matrix values stay exact.
    """
    src, dst = edge_index[0], edge_index[1]
    counts = jnp.zeros((n_pad, n_pad), jnp.float32).at[dst, src].add(1.0)
    deg = jnp.sum(counts, axis=1, keepdims=True)
    inv_deg = 1.0 / jnp.maximum(deg, 1.0)      # empty neighborhood -> agg = 0
    return counts.astype(jnp.bfloat16), inv_deg


def prepare_params(params, in_p, h_p, c_p):
    """Pre-transpose, zero-pad to lane-dense shapes, stack lin_l/lin_r, cast bf16."""
    def stacked(wl, wr):
        # rows [0:h] multiply the aggregated term, rows [h_p:h_p+h] the self term
        w = jnp.zeros((2 * h_p, h_p), jnp.float32)
        w = w.at[: wl.shape[1], : wl.shape[0]].set(wl.T)
        w = w.at[h_p: h_p + wr.shape[1], : wr.shape[0]].set(wr.T)
        return w.astype(jnp.bfloat16)

    return {
        "w_lin_t": _pad2(params["w_lin"].T, in_p, h_p).astype(jnp.bfloat16),
        "b_lin": _pad2(params["b_lin"], 1, h_p),
        "w1": stacked(params["w_l1"], params["w_r1"]),
        "b1": _pad2(params["b_l1"], 1, h_p),
        "w2": stacked(params["w_l2"], params["w_r2"]),
        "b2": _pad2(params["b_l2"], 1, h_p),
        "w_out_t": _pad2(params["weight"].T, h_p, c_p).astype(jnp.bfloat16),
    }


def _choose_tiles(n, tile_n_default):
    n_p = _round_up(n, LANE)
    if n_p >= TILE_K_DEFAULT:
        tile_n, tile_k = tile_n_default, TILE_K_DEFAULT
        n_p = _round_up(n_p, max(tile_n, tile_k))
    else:
        tile_n = min(tile_n_default, n_p)
        n_p = _round_up(n_p, tile_n)
        tile_k = n_p                    # single reduction block for tiny graphs
    return n_p, tile_n, tile_k


def mymodel_forward(x, edge_index, params):
    n, in_feats = x.shape
    h_feats = params["w_lin"].shape[0]
    num_classes = params["weight"].shape[0]

    kind = _tpu_kind()
    vmem_limit = _vmem_limit_bytes(kind)
    split_dots = _use_split_dots(kind)

    in_p = _round_up(in_feats, LANE)
    h_p = _round_up(h_feats, LANE)
    c_p = _round_up(num_classes, LANE)
    n_p, tile_n, tile_k = _choose_tiles(n, _row_tile_default(kind))

    row_grid = (n_p // tile_n,)
    sage_grid = (n_p // tile_n, n_p // tile_k)   # (rows "parallel", k "arbitrary")
    # NOTE: on v7x keep the number of row tiles >= 2 (ideally even) for real
    # graphs so the "parallel" axis actually splits across both TensorCores.

    prep = prepare_params(params, in_p, h_p, c_p)
    x_p = _pad2(x.astype(jnp.bfloat16), n_p, in_p)     # bf16 on the host
    a_p, inv_deg = build_adjacency(edge_index, n_p)    # bf16 counts, f32 1/deg

    row_cp = pltpu.CompilerParams(
        dimension_semantics=("parallel",), vmem_limit_bytes=vmem_limit)
    sage_cp = pltpu.CompilerParams(
        dimension_semantics=("parallel", "arbitrary"),
        vmem_limit_bytes=vmem_limit)

    # ---- kernel 1: H1 = relu(x @ Wlin.T + b_lin), emitted bf16 -----------------
    h1 = pl.pallas_call(
        linear_relu_kernel,
        out_shape=jax.ShapeDtypeStruct((n_p, h_p), jnp.bfloat16),
        grid=row_grid,
        in_specs=[
            pl.BlockSpec((tile_n, in_p), lambda i: (i, 0)),   # x rows (bf16)
            pl.BlockSpec((in_p, h_p), lambda i: (0, 0)),      # Wlin.T (resident)
            pl.BlockSpec((1, h_p), lambda i: (0, 0)),         # bias (f32)
        ],
        out_specs=pl.BlockSpec((tile_n, h_p), lambda i: (i, 0)),
        compiler_params=row_cp,
        cost_estimate=pl.CostEstimate(
            flops=2 * n_p * in_p * h_p,
            transcendentals=0,
            bytes_accessed=2 * n_p * in_p + 2 * in_p * h_p + 2 * n_p * h_p),
    )(x_p, prep["w_lin_t"], prep["b_lin"])

    # ---- SAGE layers: K-tiled A @ H with an f32 VMEM accumulator ---------------
    # Invariant weight/bias blocks are tiny post-K-tiling, so default double
    # buffering is kept for them (a Buffered(1) pipeline_mode would save <0.5 MiB).
    sage_in_specs = [
        pl.BlockSpec((tile_n, tile_k), lambda i, k: (i, k)),   # A count block
        pl.BlockSpec((tile_k, h_p), lambda i, k: (k, 0)),      # H contraction block
        pl.BlockSpec((tile_n, h_p), lambda i, k: (i, 0)),      # H self rows
        pl.BlockSpec((tile_n, 1), lambda i, k: (i, 0)),        # f32 1/deg
        pl.BlockSpec((2 * h_p, h_p), lambda i, k: (0, 0)),     # [Wl.T ; Wr.T]
        pl.BlockSpec((1, h_p), lambda i, k: (0, 0)),           # bias
    ]
    sage_scratch = [pltpu.VMEM((tile_n, h_p), jnp.float32)]
    sage_flops = 2 * n_p * n_p * h_p + 2 * n_p * (2 * h_p) * h_p
    sage_bytes = (2 * n_p * n_p + 2 * (n_p // tile_n) * n_p * h_p
                  + 2 * n_p * h_p + 4 * n_p + 2 * 2 * h_p * h_p + 4 * h_p)

    # kernel 2: sage1 (no ReLU after it: `self.linear` is an nn.Module -> truthy)
    h2 = pl.pallas_call(
        functools.partial(sage_kernel, split_dots),
        out_shape=jax.ShapeDtypeStruct((n_p, h_p), jnp.bfloat16),
        grid=sage_grid,
        in_specs=sage_in_specs,
        out_specs=pl.BlockSpec((tile_n, h_p), lambda i, k: (i, 0)),
        scratch_shapes=sage_scratch,
        compiler_params=sage_cp,
        cost_estimate=pl.CostEstimate(
            flops=sage_flops, transcendentals=0,
            bytes_accessed=sage_bytes + 2 * n_p * h_p),
    )(a_p, h1, h1, inv_deg, prep["w1"], prep["b1"])

    # kernel 3: sage2 + ReLU + final projection x @ weight.T (f32 output)
    out_p = pl.pallas_call(
        functools.partial(sage_relu_proj_kernel, split_dots),
        out_shape=jax.ShapeDtypeStruct((n_p, c_p), jnp.float32),
        grid=sage_grid,
        in_specs=sage_in_specs + [
            pl.BlockSpec((h_p, c_p), lambda i, k: (0, 0)),     # weight.T
        ],
        out_specs=pl.BlockSpec((tile_n, c_p), lambda i, k: (i, 0)),
        scratch_shapes=sage_scratch,
        compiler_params=sage_cp,
        cost_estimate=pl.CostEstimate(
            flops=sage_flops + 2 * n_p * h_p * c_p, transcendentals=0,
            bytes_accessed=sage_bytes + 2 * h_p * c_p + 4 * n_p * c_p),
    )(a_p, h2, h2, inv_deg, prep["w2"], prep["b2"], prep["w_out_t"])

    return out_p[:n, :num_classes]


# ----------------------------------------------------------------------------
# Pure-JAX f32 reference (same math, torch layouts) for a correctness check.
# ----------------------------------------------------------------------------
def reference_forward(x, edge_index, params):
    n = x.shape[0]
    src, dst = edge_index[0], edge_index[1]
    adj = jnp.zeros((n, n), jnp.float32).at[dst, src].add(1.0)
    deg = jnp.sum(adj, axis=1, keepdims=True)
    a = adj / jnp.maximum(deg, 1.0)

    h = jnp.maximum(x @ params["w_lin"].T + params["b_lin"], 0.0)
    h = (a @ h) @ params["w_l1"].T + params["b_l1"] + h @ params["w_r1"].T
    h = (a @ h) @ params["w_l2"].T + params["b_l2"] + h @ params["w_r2"].T
    h = jnp.maximum(h, 0.0)
    return h @ params["weight"].T


# ----------------------------------------------------------------------------
# Deterministic parameter init (kaiming_normal_ semantics for 2-D params).
# ----------------------------------------------------------------------------
def kaiming_normal(key, shape):
    fan_in = shape[1]
    std = (2.0 / fan_in) ** 0.5
    return std * jax.random.normal(key, shape, jnp.float32)


def init_params(key, in_feats, h_feats, num_classes):
    ks = jax.random.split(key, 10)
    return {
        "w_lin": kaiming_normal(ks[0], (h_feats, in_feats)),
        "b_lin": jnp.zeros((1, h_feats), jnp.float32),
        "w_l1": kaiming_normal(ks[1], (h_feats, h_feats)),
        "b_l1": jnp.zeros((1, h_feats), jnp.float32),
        "w_r1": kaiming_normal(ks[2], (h_feats, h_feats)),
        "w_l2": kaiming_normal(ks[3], (h_feats, h_feats)),
        "b_l2": jnp.zeros((1, h_feats), jnp.float32),
        "w_r2": kaiming_normal(ks[4], (h_feats, h_feats)),
        "weight": kaiming_normal(ks[5], (num_classes, h_feats)),
    }


if __name__ == "__main__":
    # Small shapes consistent with the module's forward.
    N = 16          # number of graph nodes
    IN_FEATS = 16
    H_FEATS = 32
    NUM_CLASSES = 8
    E = 48          # number of edges

    key = jax.random.PRNGKey(0)
    k_x, k_src, k_dst, k_p = jax.random.split(key, 4)

    x = jax.random.normal(k_x, (N, IN_FEATS), jnp.float32)
    src = jax.random.randint(k_src, (E,), 0, N, jnp.int32)
    dst = jax.random.randint(k_dst, (E,), 0, N, jnp.int32)
    edge_index = jnp.stack([src, dst], axis=0)      # (2, E), PyG convention

    params = init_params(k_p, IN_FEATS, H_FEATS, NUM_CLASSES)

    out = mymodel_forward(x, edge_index, params)
    out = jax.block_until_ready(out)

    assert out.shape == (N, NUM_CLASSES), out.shape
    assert bool(jnp.all(jnp.isfinite(out)))

    # Loose tolerance vs. f32 reference (bf16 MXU operands + bf16 intermediates,
    # f32 accumulation everywhere).
    ref = reference_forward(x, edge_index, params)
    scale = jnp.maximum(1.0, jnp.max(jnp.abs(ref)))
    max_err = jnp.max(jnp.abs(out - ref))
    assert float(max_err) <= 5e-2 * float(scale), (float(max_err), float(scale))

    print("KERNEL_OK")
</pallas_src>

<mosaic_0001>
module attributes {stable_mosaic.version = 11 : i64} {
  func.func @linear_relu_kernel(%arg0: i32, %arg1: memref<128x128xbf16, #tpu.memory_space<vmem>>, %arg2: memref<128x128xbf16, #tpu.memory_space<vmem>>, %arg3: memref<1x128xf32, #tpu.memory_space<vmem>>, %arg4: memref<128x128xbf16, #tpu.memory_space<vmem>>) attributes {dimension_semantics = [#tpu.dimension_semantics<parallel>], iteration_bounds = array<i64: 1>, scalar_prefetch = 0 : i64, scratch_operands = 0 : i64, tpu.core_type = #tpu.core_type<tc>, window_params = [{transform_indices = @transform_0, window_bounds = array<i64: 128, 128>}, {pipeline_mode = #tpu.pipeline_mode<synchronous>, transform_indices = @transform_1, window_bounds = array<i64: 128, 128>}, {pipeline_mode = #tpu.pipeline_mode<synchronous>, transform_indices = @transform_2, window_bounds = array<i64: 1, 128>}, {transform_indices = @transform_3, window_bounds = array<i64: 128, 128>}]} {
    %c0 = arith.constant 0 : index
    %c0_0 = arith.constant 0 : index
    %0 = vector.load %arg1[%c0, %c0_0] : memref<128x128xbf16, #tpu.memory_space<vmem>>, vector<128x128xbf16>
    %c0_1 = arith.constant 0 : index
    %c0_2 = arith.constant 0 : index
    %1 = vector.load %arg2[%c0_1, %c0_2] : memref<128x128xbf16, #tpu.memory_space<vmem>>, vector<128x128xbf16>
    %cst = arith.constant dense<0.000000e+00> : vector<128x128xf32>
    %2 = tpu.matmul %0, %1, %cst {dimension_numbers = #tpu.dot_dimension_numbers<[1], [0], [0], [1], [0, 0, 1, 1], [], []>} : vector<128x128xbf16>, vector<128x128xbf16>, vector<128x128xf32> -> vector<128x128xf32>
    %c0_3 = arith.constant 0 : index
    %c0_4 = arith.constant 0 : index
    %3 = vector.load %arg3[%c0_3, %c0_4] : memref<1x128xf32, #tpu.memory_space<vmem>>, vector<1x128xf32>
    %4 = vector.broadcast %3 : vector<1x128xf32> to vector<128x128xf32>
    %5 = arith.addf %2, %4 : vector<128x128xf32>
    %cst_5 = arith.constant 0.000000e+00 : f32
    %6 = vector.broadcast %cst_5 : f32 to vector<128x128xf32>
    %7 = arith.maximumf %5, %6 : vector<128x128xf32>
    %8 = arith.truncf %7 : vector<128x128xf32> to vector<128x128xbf16>
    %c0_6 = arith.constant 0 : index
    %c0_7 = arith.constant 0 : index
    %9 = vector.load %arg4[%c0_6, %c0_7] : memref<128x128xbf16, #tpu.memory_space<vmem>>, vector<128x128xbf16>
    tpu.vector_store %arg4[%c0_6, %c0_7], %8 {strides = array<i32>} : memref<128x128xbf16, #tpu.memory_space<vmem>>, vector<128x128xbf16>,
    return
  }
  func.func @transform_0(%arg0: i32) -> (i32, i32) {
    %c0_i32 = arith.constant 0 : i32
    %c0_i32_0 = arith.constant 0 : i32
    return %arg0, %c0_i32 : i32, i32
  }
  func.func @transform_1(%arg0: i32) -> (i32, i32) {
    %c0_i32 = arith.constant 0 : i32
    %c0_i32_0 = arith.constant 0 : i32
    %c0_i32_1 = arith.constant 0 : i32
    return %c0_i32, %c0_i32_0 : i32, i32
  }
  func.func @transform_2(%arg0: i32) -> (i32, i32) {
    %c0_i32 = arith.constant 0 : i32
    %c0_i32_0 = arith.constant 0 : i32
    %c0_i32_1 = arith.constant 0 : i32
    return %c0_i32, %c0_i32_0 : i32, i32
  }
  func.func @transform_3(%arg0: i32) -> (i32, i32) {
    %c0_i32 = arith.constant 0 : i32
    %c0_i32_0 = arith.constant 0 : i32
    return %arg0, %c0_i32 : i32, i32
  }
}

</mosaic_0001>

<llo_original>
// kernel: tpu_custom_call.1
$region0: #{tpu_custom_call.1}
  #allocation0 [shape = 'u32[]', space=smem, size = 0x4, offset = 0x4, fixed_abs, tag = 'smem constant byte address 0x4 - core index']
  #allocation1 [shape = 'u32[144,128]{1,0:T(1,128)}', space=vmem, size = 0x12000, scoped, tag = 'internal scratch']
  %s0 = inlined_call_operand.hbm [shape: bf16[128,128], index: 0, kind: input, shape index: {}]
  %s1 = inlined_call_operand.hbm [shape: bf16[128,128], index: 1, kind: input, shape index: {}]
  %s2 = inlined_call_operand.vmem [shape: f32[1,128], index: 2, kind: input, shape index: {}]
  %s3 = inlined_call_operand.hbm [shape: bf16[128,128], index: 3, kind: output, shape index: {}]
  %s4 = sld [smem:[#allocation0]]
  $region30: #{tpu_custom_call.1} parent=0
    _
  %s6 = ssub.s32 1, %s4
  %s7 = scalar_select 0, %s6, %s4
  $region1: #{tpu_custom_call.1} parent=0
    #allocation2 [shape = 'u8[32768]{0}', space=vmem, size = 0x8000, scoped, tag = 'input window, operand 0, single buffered']
    #allocation3 [shape = 's32[1]{0}', space=sflag, size = 0x4, scoped, tag = 'scoped memory for tpu_custom_call.1']
    #allocation4 [shape = 's32[1]{0}', space=sflag, size = 0x4, scoped, tag = 'scoped memory for tpu_custom_call.1']
    #allocation5 [shape = 'u8[32768]{0}', space=vmem, size = 0x8000, scoped, tag = 'input window, operand 1, single buffered']
    #allocation6 [shape = 's32[1]{0}', space=sflag, size = 0x4, scoped, tag = 'scoped memory for tpu_custom_call.1']
    #allocation7 [shape = 'u8[32768]{0}', space=vmem, size = 0x8000, scoped, tag = 'output window, operand 0, single buffered']
    %8 = vsyncpa [#allocation3], 0
    %9 = vsyncpa [#allocation6], 0
    %10 = vsyncpa [#allocation4], 0
    // Predicated region
    $region2: #{tpu_custom_call.1} parent=1 // pred_check
      _
    $region3: #{tpu_custom_call.1} parent=1 // pred_check_branch
      %12 = sbr.rel (0) target = $region5
    $region4: #{tpu_custom_call.1} parent=1 // pred_region
      %s14 = ssub.s32 1024, 1024
      %15 = vsyncadd [#allocation3], %s14
      %s16 = sshll.u32 [#allocation2], 4
      %s17 = int_to_ptr.vmem [resolvable:$true] %s16
      %22 = dma.hbm_to_vmem [thread:$0]  %s0, 1024, %s17, [#allocation3], 64, 64, 4
    $region5: #{tpu_custom_call.1} parent=1 // pred_fallthru
      _
    // Predicated region
    $region6: #{tpu_custom_call.1} parent=1 // pred_check
      _
    $region7: #{tpu_custom_call.1} parent=1 // pred_check_branch
      %24 = sbr.rel (0) target = $region9
    $region8: #{tpu_custom_call.1} parent=1 // pred_region
      %s26 = ssub.s32 1024, 1024
      %27 = vsyncadd [#allocation6], %s26
      %s28 = sshll.u32 [#allocation5], 4
      %s29 = int_to_ptr.vmem [resolvable:$true] %s28
      %34 = dma.hbm_to_vmem [thread:$0]  %s1, 1024, %s29, [#allocation6], 64, 64, 4
    $region9: #{tpu_custom_call.1} parent=1 // pred_fallthru
      _
    // Predicated region
    $region10: #{tpu_custom_call.1} parent=1 // pred_check
      _
    $region11: #{tpu_custom_call.1} parent=1 // pred_check_branch
      %36 = sbr.rel (0) target = $region13
    $region12: #{tpu_custom_call.1} parent=1 // pred_region
      _
    $region13: #{tpu_custom_call.1} parent=1 // pred_fallthru
      _
    // Predicated region
    $region14: #{tpu_custom_call.1} parent=1 // pred_check
      _
    $region15: #{tpu_custom_call.1} parent=1 // pred_check_branch
      %38 = sbr.rel (0) target = $region17
    $region16: #{tpu_custom_call.1} parent=1 // pred_region
      %39 = dma.done [#allocation3], 1024
    $region17: #{tpu_custom_call.1} parent=1 // pred_fallthru
      _
    // Predicated region
    $region18: #{tpu_custom_call.1} parent=1 // pred_check
      _
    $region19: #{tpu_custom_call.1} parent=1 // pred_check_branch
      %41 = sbr.rel (0) target = $region21
    $region20: #{tpu_custom_call.1} parent=1 // pred_region
      %42 = dma.done [#allocation6], 1024
    $region21: #{tpu_custom_call.1} parent=1 // pred_fallthru
      _
    %v44 = vld [vmem:[#allocation2] sm:$0xf]
    %v45 = vld [vmem:[#allocation2 + $0x4] sm:$0xf]
    %v46 = vld [vmem:[#allocation2 + $0x8] sm:$0xf]
    %v47 = vld [vmem:[#allocation2 + $0xc] sm:$0xf]
    %v48 = vld [vmem:[#allocation2 + $0x10] sm:$0xf]
    %v49 = vld [vmem:[#allocation2 + $0x14] sm:$0xf]
    %v50 = vld [vmem:[#allocation2 + $0x18] sm:$0xf]
    %v51 = vld [vmem:[#allocation2 + $0x1c] sm:$0xf]
    %v52 = vld [vmem:[#allocation2 + $0x20] sm:$0xf]
    %v53 = vld [vmem:[#allocation2 + $0x24] sm:$0xf]
    %v54 = vld [vmem:[#allocation2 + $0x28] sm:$0xf]
    %v55 = vld [vmem:[#allocation2 + $0x2c] sm:$0xf]
    %v56 = vld [vmem:[#allocation2 + $0x30] sm:$0xf]
    %v57 = vld [vmem:[#allocation2 + $0x34] sm:$0xf]
    %v58 = vld [vmem:[#allocation2 + $0x38] sm:$0xf]
    %v59 = vld [vmem:[#allocation2 + $0x3c] sm:$0xf]
    %v60 = vld [vmem:[#allocation5] sm:$0xf]
    %v61 = vld [vmem:[#allocation5 + $0x4] sm:$0xf]
    %v62 = vld [vmem:[#allocation5 + $0x8] sm:$0xf]
    %v63 = vld [vmem:[#allocation5 + $0xc] sm:$0xf]
    %v64 = vld [vmem:[#allocation5 + $0x10] sm:$0xf]
    %v65 = vld [vmem:[#allocation5 + $0x14] sm:$0xf]
    %v66 = vld [vmem:[#allocation5 + $0x18] sm:$0xf]
    %v67 = vld [vmem:[#allocation5 + $0x1c] sm:$0xf]
    %v68 = vld [vmem:[#allocation5 + $0x20] sm:$0xf]
    %v69 = vld [vmem:[#allocation5 + $0x24] sm:$0xf]
    %v70 = vld [vmem:[#allocation5 + $0x28] sm:$0xf]
    %v71 = vld [vmem:[#allocation5 + $0x2c] sm:$0xf]
    %v72 = vld [vmem:[#allocation5 + $0x30] sm:$0xf]
    %v73 = vld [vmem:[#allocation5 + $0x34] sm:$0xf]
    %v74 = vld [vmem:[#allocation5 + $0x38] sm:$0xf]
    %v75 = vld [vmem:[#allocation5 + $0x3c] sm:$0xf]
    %v76 = vld [vmem:[%s2] sm:$0x1]
    %v78 = vlaneseq
    %v79 = vshrl.u32 %v78, 7
    %v80 = vsub.s32 0, %v79
    %v81 = vrot.slane %v76, %v80
    %v99 = vunpack.c.l.b16 %v44
    %v100 = vunpack.c.l.b16 %v45
    %v101 = vunpack.c.l.b16 %v46
    %v102 = vunpack.c.l.b16 %v47
    %v103 = vunpack.c.l.b16 %v48
    %v104 = vunpack.c.l.b16 %v49
    %v105 = vunpack.c.l.b16 %v50
    %v106 = vunpack.c.l.b16 %v51
    %v107 = vunpack.c.l.b16 %v52
    %v108 = vunpack.c.l.b16 %v53
    %v109 = vunpack.c.l.b16 %v54
    %v110 = vunpack.c.l.b16 %v55
    %v111 = vunpack.c.l.b16 %v56
    %v112 = vunpack.c.l.b16 %v57
    %v113 = vunpack.c.l.b16 %v58
    %v114 = vunpack.c.l.b16 %v59
    %v115 = vpack.c.b16 %v100, %v99
    %v116 = vpack.c.b16 %v102, %v101
    %v117 = vpack.c.b16 %v104, %v103
    %v118 = vpack.c.b16 %v106, %v105
    %v119 = vpack.c.b16 %v108, %v107
    %v120 = vpack.c.b16 %v110, %v109
    %v121 = vpack.c.b16 %v112, %v111
    %v122 = vpack.c.b16 %v114, %v113
    %v147 = vunpack.c.l.b16 %v60
    %v148 = vunpack.c.l.b16 %v61
    %v149 = vunpack.c.l.b16 %v62
    %v150 = vunpack.c.l.b16 %v63
    %v151 = vunpack.c.l.b16 %v64
    %v152 = vunpack.c.l.b16 %v65
    %v153 = vunpack.c.l.b16 %v66
    %v154 = vunpack.c.l.b16 %v67
    %v155 = vunpack.c.l.b16 %v68
    %v156 = vunpack.c.l.b16 %v69
    %v157 = vunpack.c.l.b16 %v70
    %v158 = vunpack.c.l.b16 %v71
    %v159 = vunpack.c.l.b16 %v72
    %v160 = vunpack.c.l.b16 %v73
    %v161 = vunpack.c.l.b16 %v74
    %v162 = vunpack.c.l.b16 %v75
    %v163 = vpack.c.b16 %v148, %v147
    %v164 = vpack.c.b16 %v150, %v149
    %v165 = vpack.c.b16 %v152, %v151
    %v166 = vpack.c.b16 %v154, %v153
    %v167 = vpack.c.b16 %v156, %v155
    %v168 = vpack.c.b16 %v158, %v157
    %v169 = vpack.c.b16 %v160, %v159
    %v170 = vpack.c.b16 %v162, %v161
    %179 = vmatprep.subr.bf16.mxu0 0
    %180 = vmatpush1.bf16.msra.mxu0 %v163
    %181 = vmatprep.subr.bf16.mxu0 0
    %182 = vmatpush1.bf16.msra.mxu0 %v164
    %183 = vmatprep.subr.bf16.mxu0 0
    %184 = vmatpush1.bf16.msra.mxu0 %v165
    %185 = vmatprep.subr.bf16.mxu0 0
    %186 = vmatpush1.bf16.msra.mxu0 %v166
    %187 = vmatprep.subr.bf16.mxu0 0
    %188 = vmatpush1.bf16.msra.mxu0 %v167
    %189 = vmatprep.subr.bf16.mxu0 0
    %190 = vmatpush1.bf16.msra.mxu0 %v168
    %191 = vmatprep.subr.bf16.mxu0 0
    %192 = vmatpush1.bf16.msra.mxu0 %v169
    %193 = vmatprep.subr.bf16.mxu0 0
    %194 = vmatpush1.bf16.msra.mxu0 %v170
    %195 = vmatprep.subr.bf16.mxu0 0
    %196 = vmatpush1.bf16.msra.mxu0 0
    %197 = vmatprep.subr.bf16.mxu0 0
    %198 = vmatpush1.bf16.msra.mxu0 0
    %199 = vmatprep.subr.bf16.mxu0 0
    %200 = vmatpush1.bf16.msra.mxu0 0
    %201 = vmatprep.subr.bf16.mxu0 0
    %202 = vmatpush1.bf16.msra.mxu0 0
    %203 = vmatprep.subr.bf16.mxu0 0
    %204 = vmatpush1.bf16.msra.mxu0 0
    %205 = vmatprep.subr.bf16.mxu0 0
    %206 = vmatpush1.bf16.msra.mxu0 0
    %207 = vmatprep.subr.bf16.mxu0 0
    %208 = vmatpush1.bf16.msra.mxu0 0
    %209 = vmatprep.subr.bf16.mxu0 0
    %210 = vmatpush1.bf16.msra.mxu0 0
    %211 = vmatprep.mubr.bf16.mxu0 0
    %212 = vmatmul.mubr.bf16.gmra.mrb[0].mxu0 %v115
    %v213 = vpop.f32.mrb[0].mxu0
    %v214 = vadd.f32 %v81, %v213
    %v215 = vpop.f32.mrb[0].mxu0
    %v216 = vpop.f32.mrb[0].mxu0
    %v217 = vadd.f32 %v81, %v216
    %v218 = vpop.f32.mrb[0].mxu0
    %219 = vmatprep.mubr.bf16.mxu0 0
    %220 = vmatmul.mubr.bf16.gmra.mrb[0].mxu0 %v116
    %v221 = vpop.f32.mrb[0].mxu0
    %v222 = vadd.f32 %v81, %v221
    %v223 = vpop.f32.mrb[0].mxu0
    %v224 = vpop.f32.mrb[0].mxu0
    %v225 = vadd.f32 %v81, %v224
    %v226 = vpop.f32.mrb[0].mxu0
    %227 = vmatprep.mubr.bf16.mxu0 0
    %228 = vmatmul.mubr.bf16.gmra.mrb[0].mxu0 %v117
    %v229 = vpop.f32.mrb[0].mxu0
    %v230 = vadd.f32 %v81, %v229
    %v231 = vpop.f32.mrb[0].mxu0
    %v232 = vpop.f32.mrb[0].mxu0
    %v233 = vadd.f32 %v81, %v232
    %v234 = vpop.f32.mrb[0].mxu0
    %235 = vmatprep.mubr.bf16.mxu0 0
    %236 = vmatmul.mubr.bf16.gmra.mrb[0].mxu0 %v118
    %v237 = vpop.f32.mrb[0].mxu0
    %v238 = vadd.f32 %v81, %v237
    %v239 = vpop.f32.mrb[0].mxu0
    %v240 = vpop.f32.mrb[0].mxu0
    %v241 = vadd.f32 %v81, %v240
    %v242 = vpop.f32.mrb[0].mxu0
    %243 = vmatprep.mubr.bf16.mxu0 0
    %244 = vmatmul.mubr.bf16.gmra.mrb[0].mxu0 %v119
    %v245 = vpop.f32.mrb[0].mxu0
    %v246 = vadd.f32 %v81, %v245
    %v247 = vpop.f32.mrb[0].mxu0
    %v248 = vpop.f32.mrb[0].mxu0
    %v249 = vadd.f32 %v81, %v248
    %v250 = vpop.f32.mrb[0].mxu0
    %251 = vmatprep.mubr.bf16.mxu0 0
    %252 = vmatmul.mubr.bf16.gmra.mrb[0].mxu0 %v120
    %v253 = vpop.f32.mrb[0].mxu0
    %v254 = vadd.f32 %v81, %v253
    %v255 = vpop.f32.mrb[0].mxu0
    %v256 = vpop.f32.mrb[0].mxu0
    %v257 = vadd.f32 %v81, %v256
    %v258 = vpop.f32.mrb[0].mxu0
    %259 = vmatprep.mubr.bf16.mxu0 0
    %260 = vmatmul.mubr.bf16.gmra.mrb[0].mxu0 %v121
    %v261 = vpop.f32.mrb[0].mxu0
    %v262 = vadd.f32 %v81, %v261
    %v263 = vpop.f32.mrb[0].mxu0
    %v264 = vpop.f32.mrb[0].mxu0
    %v265 = vadd.f32 %v81, %v264
    %v266 = vpop.f32.mrb[0].mxu0
    %267 = vmatprep.mubr.bf16.mxu0 0
    %268 = vmatmul.mubr.bf16.gmra.mrb[0].mxu0 %v122
    %v269 = vpop.f32.mrb[0].mxu0
    %v270 = vadd.f32 %v81, %v269
    %v271 = vpop.f32.mrb[0].mxu0
    %v272 = vpop.f32.mrb[0].mxu0
    %v273 = vadd.f32 %v81, %v272
    %v274 = vpop.f32.mrb[0].mxu0
    %275 = vdwg.mxu0
    %v276 = vmax.f32 %v214, 0.0
    %v277 = vmax.f32 %v217, 0.0
    %v278 = vmax.f32 %v222, 0.0
    %v279 = vmax.f32 %v225, 0.0
    %v280 = vmax.f32 %v230, 0.0
    %v281 = vmax.f32 %v233, 0.0
    %v282 = vmax.f32 %v238, 0.0
    %v283 = vmax.f32 %v241, 0.0
    %v284 = vmax.f32 %v246, 0.0
    %v285 = vmax.f32 %v249, 0.0
    %v286 = vmax.f32 %v254, 0.0
    %v287 = vmax.f32 %v257, 0.0
    %v288 = vmax.f32 %v262, 0.0
    %v289 = vmax.f32 %v265, 0.0
    %v290 = vmax.f32 %v270, 0.0
    %v291 = vmax.f32 %v273, 0.0
    %v292 = vpack.c.bf16 %v277, %v276
    %v293 = vpack.c.bf16 %v279, %v278
    %v294 = vpack.c.bf16 %v281, %v280
    %v295 = vpack.c.bf16 %v283, %v282
    %v296 = vpack.c.bf16 %v285, %v284
    %v297 = vpack.c.bf16 %v287, %v286
    %v298 = vpack.c.bf16 %v289, %v288
    %v299 = vpack.c.bf16 %v291, %v290
    %v308 = vunpack.c.l.b16 %v292
    %v309 = vunpack.c.h.b16 %v292
    %v310 = vunpack.c.l.b16 %v293
    %v311 = vunpack.c.h.b16 %v293
    %v312 = vunpack.c.l.b16 %v294
    %v313 = vunpack.c.h.b16 %v294
    %v314 = vunpack.c.l.b16 %v295
    %v315 = vunpack.c.h.b16 %v295
    %v316 = vunpack.c.l.b16 %v296
    %v317 = vunpack.c.h.b16 %v296
    %v318 = vunpack.c.l.b16 %v297
    %v319 = vunpack.c.h.b16 %v297
    %v320 = vunpack.c.l.b16 %v298
    %v321 = vunpack.c.h.b16 %v298
    %v322 = vunpack.c.l.b16 %v299
    %v323 = vunpack.c.h.b16 %v299
    %v324 = vpack.c.b16 %v308, %v308
    %v325 = vpack.c.b16 %v309, %v309
    %v326 = vpack.c.b16 %v310, %v310
    %v327 = vpack.c.b16 %v311, %v311
    %v328 = vpack.c.b16 %v312, %v312
    %v329 = vpack.c.b16 %v313, %v313
    %v330 = vpack.c.b16 %v314, %v314
    %v331 = vpack.c.b16 %v315, %v315
    %v332 = vpack.c.b16 %v316, %v316
    %v333 = vpack.c.b16 %v317, %v317
    %v334 = vpack.c.b16 %v318, %v318
    %v335 = vpack.c.b16 %v319, %v319
    %v336 = vpack.c.b16 %v320, %v320
    %v337 = vpack.c.b16 %v321, %v321
    %v338 = vpack.c.b16 %v322, %v322
    %v339 = vpack.c.b16 %v323, %v323
    %356 = vst [vmem:[#allocation7] sm:$0xf] %v324
    %357 = vst [vmem:[#allocation7 + $0x4] sm:$0xf] %v325
    %358 = vst [vmem:[#allocation7 + $0x8] sm:$0xf] %v326
    %359 = vst [vmem:[#allocation7 + $0xc] sm:$0xf] %v327
    %360 = vst [vmem:[#allocation7 + $0x10] sm:$0xf] %v328
    %361 = vst [vmem:[#allocation7 + $0x14] sm:$0xf] %v329
    %362 = vst [vmem:[#allocation7 + $0x18] sm:$0xf] %v330
    %363 = vst [vmem:[#allocation7 + $0x1c] sm:$0xf] %v331
    %364 = vst [vmem:[#allocation7 + $0x20] sm:$0xf] %v332
    %365 = vst [vmem:[#allocation7 + $0x24] sm:$0xf] %v333
    %366 = vst [vmem:[#allocation7 + $0x28] sm:$0xf] %v334
    %367 = vst [vmem:[#allocation7 + $0x2c] sm:$0xf] %v335
    %368 = vst [vmem:[#allocation7 + $0x30] sm:$0xf] %v336
    %369 = vst [vmem:[#allocation7 + $0x34] sm:$0xf] %v337
    %370 = vst [vmem:[#allocation7 + $0x38] sm:$0xf] %v338
    %371 = vst [vmem:[#allocation7 + $0x3c] sm:$0xf] %v339
    // Predicated region
    $region22: #{tpu_custom_call.1} parent=1 // pred_check
      _
    $region23: #{tpu_custom_call.1} parent=1 // pred_check_branch
      %373 = sbr.rel (0) target = $region25
    $region24: #{tpu_custom_call.1} parent=1 // pred_region
      %s375 = ssub.s32 1024, 1024
      %376 = vsyncadd [#allocation4], %s375
      %s377 = sshll.u32 [#allocation7], 4
      %s378 = int_to_ptr.vmem [resolvable:$true] %s377
      %383 = dma.vmem_to_hbm [thread:$0]  %s378, 1024, %s3, [#allocation4], 64, 64, 4
    $region25: #{tpu_custom_call.1} parent=1 // pred_fallthru
      _
    // Predicated region
    $region26: #{tpu_custom_call.1} parent=1 // pred_check
      _
    $region27: #{tpu_custom_call.1} parent=1 // pred_check_branch
      %385 = sbr.rel (0) target = $region29
    $region28: #{tpu_custom_call.1} parent=1 // pred_region
      %386 = dma.done [#allocation4], 1024
    $region29: #{tpu_custom_call.1} parent=1 // pred_fallthru
      _
    %387 = vsyncpa [#allocation3], 1
    %388 = vsyncpa [#allocation6], 1
    %389 = vsyncpa [#allocation4], 1

</llo_original>
